<compile_context>
chip_gen: v7x
topology: tpu7x:2x2x1
jax: 0.10.0
libtpu: 0.0.40
codegen_flags: <defaults>
</compile_context>

<pallas_src>
import functools

import jax
import jax.numpy as jnp
from jax.experimental import pallas as pl
from jax.experimental.pallas import tpu as pltpu


# --------------------------------------------------------------------------- #
# Kernel
# --------------------------------------------------------------------------- #
def _legendre_rows(z, max_order):
    """Legendre recurrence on z = 2x - 1.

    z: (1, TN) lane-dense row.  Returns [P_0, ..., P_max_order], each (1, TN).
    The textbook divide is replaced by a compile-time reciprocal multiply.
    """
    P = [jnp.ones_like(z), z]
    for k in range(1, max_order):
        inv = 1.0 / (k + 1.0)
        P.append(((2.0 * k + 1.0) * z * P[-1] - float(k) * P[-2]) * inv)
    return P[: max_order + 1]


def _legendre2d_kernel(xy_ref, o_ref, *, max_order):
    """One grid step.

    xy_ref: (2, TN)  VMEM tile -- row 0 = x points, row 1 = y points.
    o_ref : (TN, K)  VMEM tile -- K = (max_order+1)**2, point-major layout
            (matches the PyTorch output), column m*(max_order+1)+n holds
            P_m^shifted(x) * P_n^shifted(y).
    """
    M1 = max_order + 1

    zx = 2.0 * xy_ref[0:1, :] - 1.0          # (1, TN)
    zy = 2.0 * xy_ref[1:2, :] - 1.0          # (1, TN)

    Px = _legendre_rows(zx, max_order)                               # M1 x (1, TN)
    Py = jnp.concatenate(_legendre_rows(zy, max_order), axis=0)      # (M1, TN)

    # Order-major slab: row m*M1 + n = P_m(x) * P_n(y).  Only sublane
    # broadcasts / sublane concatenation -- no cross-lane work, no masked ops.
    slab = jnp.concatenate([Px[m] * Py for m in range(M1)], axis=0)  # (K, TN)

    # Single in-kernel transpose (XLU) to point-major (TN, K) and a single
    # full-block store.  This replaces the wrapper-side XLA transpose that
    # previously re-read and re-wrote the entire N*K result from HBM.
    o_ref[...] = jnp.transpose(slab)


# --------------------------------------------------------------------------- #
# Tile sizing
# --------------------------------------------------------------------------- #
def _round_up(v, m):
    return ((v + m - 1) // m) * m


def _round_down(v, m):
    return max(m, (v // m) * m)


def _vmem_estimate(tile_n, K, M1):
    """Rough per-step VMEM bytes: double-buffered in/out blocks + temporaries.

    The (TN, K) output block is lane-padded to a multiple of 128 when K < 128.
    Temporaries: the (K, TN) slab, its transposed value, and the Px rows.
    """
    kpad = _round_up(K, 128)
    in_block = 2 * tile_n * 4
    out_block = tile_n * kpad * 4
    temps = (K + kpad + 8 * M1) * tile_n * 4
    return 2 * (in_block + out_block) + temps


_VMEM_BUDGET = 20 * 1024 * 1024        # conservative: fits every target gen
_VMEM_RAISE_ABOVE = 12 * 1024 * 1024   # v5e scoped default is 16 MiB


def _choose_tile_n(N, K, M1):
    # Aim for ~2 MiB of real output per grid step.
    tile = _round_down((2 * 1024 * 1024) // (4 * K), 128)
    tile = min(16384, max(512, tile))
    # Stay inside a conservative VMEM budget (v7x: 64 MiB physical).
    while tile > 512 and _vmem_estimate(tile, K, M1) > _VMEM_BUDGET:
        tile = _round_down(tile // 2, 128)
    # v7x has two TensorCores: keep >= 2 grid steps when there is enough work
    # so the "parallel" grid axis can be split across both cores.
    if N >= 1024:
        tile = min(tile, _round_up(_round_up(N, 2) // 2, 128))
    # Do not over-pad tiny inputs.
    tile = min(tile, _round_up(N, 128))
    return max(128, tile)


# --------------------------------------------------------------------------- #
# Wrapper
# --------------------------------------------------------------------------- #
def shifted_legendre_2d(x, y, max_order, *, tile_n=None):
    """Pallas equivalent of ShiftedLegendrePolynomial2D(max_order).forward(x, y).

    x, y: shape (N,) or (N, 1), values in [0, 1].
    Returns: (N, (max_order+1)**2) float32; column m*(max_order+1)+n holds
             P_m^shifted(x) * P_n^shifted(y)  (same ordering as the torch
             reshape of Px.unsqueeze(2) * Py.unsqueeze(1)).
    """
    if x.ndim == 2 and x.shape[1] == 1:
        x = x[:, 0]
    if y.ndim == 2 and y.shape[1] == 1:
        y = y[:, 0]
    assert x.ndim == 1 and y.ndim == 1 and x.shape == y.shape
    assert isinstance(max_order, int) and max_order >= 1

    N = x.shape[0]
    M1 = max_order + 1
    K = M1 * M1

    if tile_n is None:
        tile_n = _choose_tile_n(N, K, M1)
    assert tile_n % 128 == 0 and tile_n >= 128

    steps = -(-N // tile_n)          # ceil
    Np = steps * tile_n

    # Only the tiny (2, N) input is padded (cheap); padded points map to
    # z = -1 -> finite +-1 polynomial values that are never returned.
    xy = jnp.stack([x.astype(jnp.float32), y.astype(jnp.float32)], axis=0)
    if Np != N:
        xy = jnp.pad(xy, ((0, 0), (0, Np - N)))

    kernel = functools.partial(_legendre2d_kernel, max_order=max_order)

    compiler_kwargs = dict(dimension_semantics=("parallel",))
    est = _vmem_estimate(tile_n, K, M1)
    if est > _VMEM_RAISE_ABOVE:
        # Only raise the scoped VMEM limit when large tiles actually need it
        # (v5e scoped default is 16 MiB; 48 MiB is safe on v5e/v6e/v7x).
        compiler_kwargs["vmem_limit_bytes"] = int(
            min(48 * 1024 * 1024, max(32 * 1024 * 1024, 2 * est)))

    out = pl.pallas_call(
        kernel,
        out_shape=jax.ShapeDtypeStruct((Np, K), jnp.float32),
        grid_spec=pltpu.PrefetchScalarGridSpec(
            num_scalar_prefetch=0,
            grid=(steps,),
            in_specs=[
                # (2, tile_n): x/y fused into one contiguous lane-dense DMA.
                pl.BlockSpec((2, tile_n), lambda i: (0, i)),
            ],
            # (tile_n, K): last block dim equals the full array dim, so the
            # PyTorch (N, K) layout is emitted directly by the kernel.
            out_specs=pl.BlockSpec((tile_n, K), lambda i: (i, 0)),
        ),
        compiler_params=pltpu.CompilerParams(**compiler_kwargs),
    )(xy)

    return out if Np == N else out[:N]


# --------------------------------------------------------------------------- #
# Pure-JAX reference (mirrors the PyTorch module)
# --------------------------------------------------------------------------- #
def _reference(x, y, max_order):
    def poly_mat(v):
        z = 2.0 * v - 1.0
        P = [jnp.ones_like(z), z]
        for k in range(1, max_order):
            P.append(((2.0 * k + 1.0) * z * P[-1] - k * P[-2]) / (k + 1.0))
        return jnp.stack(P, axis=1)  # (N, M+1)

    Px = poly_mat(x)
    Py = poly_mat(y)
    out = Px[:, :, None] * Py[:, None, :]
    return out.reshape(x.shape[0], (max_order + 1) * (max_order + 1))


# --------------------------------------------------------------------------- #
# Demo / self-check
# --------------------------------------------------------------------------- #
if __name__ == "__main__":
    key = jax.random.PRNGKey(0)

    # (max_order=3, N=1024): K=16, tile_n auto-> 512, 2 parallel grid steps.
    # (max_order=7, N=1000): K=64, ragged N exercises the pad + slice path.
    for max_order, n in ((3, 1024), (7, 1000)):
        key, kx, ky = jax.random.split(key, 3)
        x = jax.random.uniform(kx, (n,), dtype=jnp.float32)   # values in [0, 1]
        y = jax.random.uniform(ky, (n,), dtype=jnp.float32)

        out = shifted_legendre_2d(x, y, max_order)
        out = jax.block_until_ready(out)

        ref = _reference(x, y, max_order)
        assert out.shape == (n, (max_order + 1) ** 2), out.shape
        assert jnp.allclose(out, ref, atol=1e-5, rtol=1e-4), (
            "mismatch vs reference", max_order, n)

    print("KERNEL_OK")
</pallas_src>

<mosaic_0001>
module attributes {stable_mosaic.version = 11 : i64} {
  func.func @_legendre2d_kernel(%arg0: i32, %arg1: memref<2x512xf32, #tpu.memory_space<vmem>>, %arg2: memref<512x16xf32, #tpu.memory_space<vmem>>) attributes {dimension_semantics = [#tpu.dimension_semantics<parallel>], iteration_bounds = array<i64: 2>, scalar_prefetch = 0 : i64, scratch_operands = 0 : i64, tpu.core_type = #tpu.core_type<tc>, window_params = [{transform_indices = @transform_0, window_bounds = array<i64: 2, 512>}, {transform_indices = @transform_1, window_bounds = array<i64: 512, 16>}]} {
    %c0 = arith.constant 0 : index
    %c0_0 = arith.constant 0 : index
    %0 = vector.load %arg1[%c0, %c0_0] : memref<2x512xf32, #tpu.memory_space<vmem>>, vector<1x512xf32>
    %cst = arith.constant 2.000000e+00 : f32
    %1 = vector.broadcast %cst : f32 to vector<1x512xf32>
    %2 = arith.mulf %1, %0 : vector<1x512xf32>
    %cst_1 = arith.constant 1.000000e+00 : f32
    %3 = vector.broadcast %cst_1 : f32 to vector<1x512xf32>
    %4 = arith.subf %2, %3 : vector<1x512xf32>
    %c1 = arith.constant 1 : index
    %c0_2 = arith.constant 0 : index
    %5 = vector.load %arg1[%c1, %c0_2] : memref<2x512xf32, #tpu.memory_space<vmem>>, vector<1x512xf32>
    %cst_3 = arith.constant 2.000000e+00 : f32
    %6 = vector.broadcast %cst_3 : f32 to vector<1x512xf32>
    %7 = arith.mulf %6, %5 : vector<1x512xf32>
    %cst_4 = arith.constant 1.000000e+00 : f32
    %8 = vector.broadcast %cst_4 : f32 to vector<1x512xf32>
    %9 = arith.subf %7, %8 : vector<1x512xf32>
    %cst_5 = arith.constant 1.000000e+00 : f32
    %10 = vector.broadcast %cst_5 : f32 to vector<1x512xf32>
    %cst_6 = arith.constant 3.000000e+00 : f32
    %11 = vector.broadcast %cst_6 : f32 to vector<1x512xf32>
    %12 = arith.mulf %11, %4 : vector<1x512xf32>
    %13 = arith.mulf %12, %4 : vector<1x512xf32>
    %cst_7 = arith.constant 1.000000e+00 : f32
    %14 = vector.broadcast %cst_7 : f32 to vector<1x512xf32>
    %15 = arith.mulf %14, %10 : vector<1x512xf32>
    %16 = arith.subf %13, %15 : vector<1x512xf32>
    %cst_8 = arith.constant 5.000000e-01 : f32
    %17 = vector.broadcast %cst_8 : f32 to vector<1x512xf32>
    %18 = arith.mulf %16, %17 : vector<1x512xf32>
    %cst_9 = arith.constant 5.000000e+00 : f32
    %19 = vector.broadcast %cst_9 : f32 to vector<1x512xf32>
    %20 = arith.mulf %19, %4 : vector<1x512xf32>
    %21 = arith.mulf %20, %18 : vector<1x512xf32>
    %cst_10 = arith.constant 2.000000e+00 : f32
    %22 = vector.broadcast %cst_10 : f32 to vector<1x512xf32>
    %23 = arith.mulf %22, %4 : vector<1x512xf32>
    %24 = arith.subf %21, %23 : vector<1x512xf32>
    %cst_11 = arith.constant 0.333333343 : f32
    %25 = vector.broadcast %cst_11 : f32 to vector<1x512xf32>
    %26 = arith.mulf %24, %25 : vector<1x512xf32>
    %cst_12 = arith.constant 1.000000e+00 : f32
    %27 = vector.broadcast %cst_12 : f32 to vector<1x512xf32>
    %cst_13 = arith.constant 3.000000e+00 : f32
    %28 = vector.broadcast %cst_13 : f32 to vector<1x512xf32>
    %29 = arith.mulf %28, %9 : vector<1x512xf32>
    %30 = arith.mulf %29, %9 : vector<1x512xf32>
    %cst_14 = arith.constant 1.000000e+00 : f32
    %31 = vector.broadcast %cst_14 : f32 to vector<1x512xf32>
    %32 = arith.mulf %31, %27 : vector<1x512xf32>
    %33 = arith.subf %30, %32 : vector<1x512xf32>
    %cst_15 = arith.constant 5.000000e-01 : f32
    %34 = vector.broadcast %cst_15 : f32 to vector<1x512xf32>
    %35 = arith.mulf %33, %34 : vector<1x512xf32>
    %cst_16 = arith.constant 5.000000e+00 : f32
    %36 = vector.broadcast %cst_16 : f32 to vector<1x512xf32>
    %37 = arith.mulf %36, %9 : vector<1x512xf32>
    %38 = arith.mulf %37, %35 : vector<1x512xf32>
    %cst_17 = arith.constant 2.000000e+00 : f32
    %39 = vector.broadcast %cst_17 : f32 to vector<1x512xf32>
    %40 = arith.mulf %39, %9 : vector<1x512xf32>
    %41 = arith.subf %38, %40 : vector<1x512xf32>
    %cst_18 = arith.constant 0.333333343 : f32
    %42 = vector.broadcast %cst_18 : f32 to vector<1x512xf32>
    %43 = arith.mulf %41, %42 : vector<1x512xf32>
    %44 = tpu.concatenate %27, %9, %35, %43 in 0 : vector<1x512xf32>, vector<1x512xf32>, vector<1x512xf32>, vector<1x512xf32> -> vector<4x512xf32>
    %45 = vector.broadcast %10 : vector<1x512xf32> to vector<4x512xf32>
    %46 = arith.mulf %45, %44 : vector<4x512xf32>
    %47 = vector.broadcast %4 : vector<1x512xf32> to vector<4x512xf32>
    %48 = arith.mulf %47, %44 : vector<4x512xf32>
    %49 = vector.broadcast %18 : vector<1x512xf32> to vector<4x512xf32>
    %50 = arith.mulf %49, %44 : vector<4x512xf32>
    %51 = vector.broadcast %26 : vector<1x512xf32> to vector<4x512xf32>
    %52 = arith.mulf %51, %44 : vector<4x512xf32>
    %53 = tpu.concatenate %46, %48, %50, %52 in 0 : vector<4x512xf32>, vector<4x512xf32>, vector<4x512xf32>, vector<4x512xf32> -> vector<16x512xf32>
    %54 = tpu.transpose %53, [1, 0] : vector<16x512xf32> -> vector<512x16xf32>
    %c0_19 = arith.constant 0 : index
    %c0_20 = arith.constant 0 : index
    %55 = vector.load %arg2[%c0_19, %c0_20] : memref<512x16xf32, #tpu.memory_space<vmem>>, vector<512x16xf32>
    tpu.vector_store %arg2[%c0_19, %c0_20], %54 {strides = array<i32>} : memref<512x16xf32, #tpu.memory_space<vmem>>, vector<512x16xf32>,
    return
  }
  func.func @transform_0(%arg0: i32) -> (i32, i32) {
    %c0_i32 = arith.constant 0 : i32
    %c0_i32_0 = arith.constant 0 : i32
    return %c0_i32, %arg0 : i32, i32
  }
  func.func @transform_1(%arg0: i32) -> (i32, i32) {
    %c0_i32 = arith.constant 0 : i32
    %c0_i32_0 = arith.constant 0 : i32
    return %arg0, %c0_i32 : i32, i32
  }
}

</mosaic_0001>

<llo_original>
// kernel: tpu_custom_call.1
$region0: #{tpu_custom_call.1}
  #allocation0 [shape = 'u32[]', space=smem, size = 0x4, offset = 0x4, fixed_abs, tag = 'smem constant byte address 0x4 - core index']
  #allocation1 [shape = 'u32[144,128]{1,0:T(1,128)}', space=vmem, size = 0x12000, scoped, tag = 'internal scratch']
  %s0 = inlined_call_operand.hbm [shape: f32[2,1024], index: 0, kind: input, shape index: {}]
  %s1 = inlined_call_operand.vmem [shape: f32[1024,16], index: 1, kind: output, shape index: {}]
  %s2 = sld [smem:[#allocation0]]
  $region41: #{tpu_custom_call.1} parent=0
    _
  %s4 = ssub.s32 1, %s2
  %s5 = scalar_select 0, %s4, %s2
  $region1: #{tpu_custom_call.1} parent=0
    #allocation2 [shape = 'u8[8192]{0}', space=vmem, size = 0x2000, scoped, tag = 'input window, operand 0']
    #allocation3 [shape = 's32[2]{0}', space=sflag, size = 0x8, scoped, tag = 'scoped memory for tpu_custom_call.1']
    %6 = vsyncpa [#allocation3], 0
    %s7 = scalar_lea.sflag [#allocation3], 1
    %8 = vsyncpa %s7, 0
    loop: start=0, step=1, limit=4
    $region2: #{tpu_custom_call.1} parent=1 // loop_pre_header
      _
    $region3: #{tpu_custom_call.1} parent=1 // loop_header
      %s10 = sphi 0, %s14
      %p11 = scmp.ge.s32.totalorder %s10, 4
      %s20 = sphi 0, %s22
      %s23 = sphi 0, %s20
      %s24 = sphi 0, %s23
      %s40 = sphi 0, %s24
      %s46 = sphi 0, %s48
      %s49 = sphi 0, %s46
      %s50 = sphi 0, %s49
      %s66 = sphi 0, %s50
    $region4: #{tpu_custom_call.1} parent=1 // loop_header_branch
      %13 = sbr.rel (%p11) target = $region8
    $region5: #{tpu_custom_call.1} parent=1 // loop_body
      %s15 = ssub.s32 %s10, 1
      %s16 = ssub.s32 %s10, 2
      %s17 = sadd.s32 %s10, 1
      %s18 = ssub.s32 %s10, %s17
      %p19 = scmp.eq.s32.totalorder %s18, 0
      %s21 = sadd.s32 %s20, 1
      %s22 = scalar_select %p19, %s20, %s21
      %p25 = pneg %p19
      %p26 = scmp.eq.s32.totalorder %s10, 1
      %p27 = por %p25, %p26
      %p28 = scmp.ne.s32.totalorder %s20, %s23
      %p29 = scmp.eq.s32.totalorder %s10, 0
      %p30 = por %p28, %p29
      %p31 = scmp.ne.s32.totalorder %s20, %s23
      %p32 = scmp.eq.s32.totalorder %s15, 1
      %p33 = por %p31, %p32
      %p34 = scmp.ne.s32.totalorder %s23, %s24
      %p35 = scmp.eq.s32.totalorder %s15, 0
      %p36 = por %p34, %p35
      %p37 = scmp.ne.s32.totalorder %s23, %s24
      %p38 = scmp.eq.s32.totalorder %s16, 1
      %p39 = por %p37, %p38
      %p41 = scmp.ne.s32.totalorder %s24, %s40
      %p42 = scmp.eq.s32.totalorder %s16, 0
      %p43 = por %p41, %p42
      %s44 = ssub.s32 %s10, %s17
      %p45 = scmp.eq.s32.totalorder %s44, 0
      %s47 = sadd.s32 %s46, 1
      %s48 = scalar_select %p45, %s46, %s47
      %p51 = pneg %p45
      %p52 = scmp.eq.s32.totalorder %s10, 1
      %p53 = por %p51, %p52
      %p54 = scmp.ne.s32.totalorder %s46, %s49
      %p55 = scmp.eq.s32.totalorder %s10, 0
      %p56 = por %p54, %p55
      %p57 = scmp.ne.s32.totalorder %s46, %s49
      %p58 = scmp.eq.s32.totalorder %s15, 1
      %p59 = por %p57, %p58
      %p60 = scmp.ne.s32.totalorder %s49, %s50
      %p61 = scmp.eq.s32.totalorder %s15, 0
      %p62 = por %p60, %p61
      %p63 = scmp.ne.s32.totalorder %s49, %s50
      %p64 = scmp.eq.s32.totalorder %s16, 1
      %p65 = por %p63, %p64
      %p67 = scmp.ne.s32.totalorder %s50, %s66
      %p68 = scmp.eq.s32.totalorder %s16, 0
      %p69 = por %p67, %p68
      %p70 = scmp.le.s32.totalorder 1, %s10
      %p71 = scmp.lt.s32.totalorder %s10, 3
      %p72 = pnand %p70, %p71
      %p73 = pneg %p72
      // Predicated region
      $region9: #{tpu_custom_call.1} parent=5 // pred_check
        _
      $region10: #{tpu_custom_call.1} parent=5 // pred_check_branch
        %75 = sbr.rel (%p72) target = $region12
      $region11: #{tpu_custom_call.1} parent=5 // pred_region
        %s76 = ssub.s32 %s10, 1
      $region12: #{tpu_custom_call.1} parent=5 // pred_fallthru
        _
      %p77 = scmp.lt.s32.totalorder %s10, 2
      // Predicated region
      $region13: #{tpu_custom_call.1} parent=5 // pred_check
        %p78 = pneg %p77
      $region14: #{tpu_custom_call.1} parent=5 // pred_check_branch
        %80 = sbr.rel (%p78) target = $region16
      $region15: #{tpu_custom_call.1} parent=5 // pred_region
        // Predicated region
        $region17: #{tpu_custom_call.1} parent=15 // pred_check
          %p81 = pneg %p30
        $region18: #{tpu_custom_call.1} parent=15 // pred_check_branch
          %83 = sbr.rel (%p81) target = $region20
        $region19: #{tpu_custom_call.1} parent=15 // pred_region
          %s84 = sand.u32 %s20, 1
          %s85 = scalar_lea.sflag [#allocation3], %s84
          %s86 = sand.u32 %s20, 1
          %s87 = smul.addr %s86, 8
          %s88 = scalar_lea.vmem [#allocation2], %s87
          %s89 = smul.u32 4, %s10
          %s91 = ssub.s32 128, 128
          %92 = vsyncadd %s85, %s91
          %s93 = smul.addr %s89, 32
          %s94 = scalar_lea.hbm %s0, %s93
          %s96 = sshll.u32 %s88, 4
          %s97 = int_to_ptr.vmem [resolvable:$true] %s96
          %99 = dma.hbm_to_vmem [thread:$0]  %s94, 128, %s97, %s85
        $region20: #{tpu_custom_call.1} parent=15 // pred_fallthru
          _
      $region16: #{tpu_custom_call.1} parent=5 // pred_fallthru
        _
      %p100 = scmp.le.s32.totalorder 1, %s10
      %p101 = scmp.lt.s32.totalorder %s10, 3
      %p102 = pnand %p100, %p101
      %p103 = pneg %p102
      // Predicated region
      $region21: #{tpu_custom_call.1} parent=5 // pred_check
        _
      $region22: #{tpu_custom_call.1} parent=5 // pred_check_branch
        %105 = sbr.rel (%p102) target = $region24
      $region23: #{tpu_custom_call.1} parent=5 // pred_region
        %s106 = ssub.s32 %s10, 1
        %s107 = sand.u32 %s23, 1
        %s108 = scalar_lea.sflag [#allocation3], %s107
        %s109 = sand.u32 %s23, 1
        %s110 = smul.addr %s109, 8
        %s111 = scalar_lea.vmem [#allocation2], %s110
        // Predicated region
        $region25: #{tpu_custom_call.1} parent=23 // pred_check
          %p112 = pneg %p36
        $region26: #{tpu_custom_call.1} parent=23 // pred_check_branch
          %114 = sbr.rel (%p112) target = $region28
        $region27: #{tpu_custom_call.1} parent=23 // pred_region
          %115 = dma.done %s108, 128
        $region28: #{tpu_custom_call.1} parent=23 // pred_fallthru
          _
        %s116 = sand.u32 %s23, 1
        %s117 = scalar_lea.sflag [#allocation3], %s116
        %s118 = sand.u32 %s23, 1
        %s119 = smul.addr %s118, 8
        %s120 = scalar_lea.vmem [#allocation2], %s119
        %p121 = pneg %p36
        %p122 = pneg %p33
        %p123 = pneg %p62
        %p124 = pneg %p59
        %s125 = smul.u32 64, %s15
        %p126 = scmp.lt.s32.totalorder %s125, 127
        %s127 = scalar_select %p126, %s125, 127
        %s128 = smul.addr %s127, 8
        %s129 = scalar_lea.vmem %s1, %s128
        %s130 = smul.u32 4, %s15
        %s131 = smul.u32 64, %s15
        %p132 = scmp.lt.s32.totalorder %s131, 127
        %s133 = scalar_select %p132, %s131, 127
        %s134 = smul.addr %s133, 8
        %s135 = scalar_lea.vmem %s1, %s134
        %s136 = smul.u32 64, %s15
        %v137 = vld [vmem:[%s111] ss:$2 sm:$0xf]
        %v138 = vmul.f32 %v137, 2.0
        %v139 = vsub.f32 %v138, 1.0
        %s140 = scalar_lea.vmem %s111, 1 [#allocation2]
        %v141 = vld [vmem:[%s140] ss:$2 sm:$0xf]
        %v142 = vmul.f32 %v141, 2.0
        %v143 = vsub.f32 %v142, 1.0
        %v144 = vmul.f32 %v139, 3.0
        %v145 = vmul.f32 %v144, %v139
        %v146 = vsub.f32 %v145, 1.0
        %v147 = vmul.f32 %v146, 0.5
        %v148 = vmul.f32 %v139, 5.0
        %v149 = vmul.f32 %v148, %v147
        %v150 = vmul.f32 %v139, 2.0
        %v151 = vsub.f32 %v149, %v150
        %v152 = vmul.f32 %v151, 0.33333334
        %v153 = vmul.f32 %v143, 3.0
        %v154 = vmul.f32 %v153, %v143
        %v155 = vsub.f32 %v154, 1.0
        %v156 = vmul.f32 %v155, 0.5
        %v157 = vmul.f32 %v143, 5.0
        %v158 = vmul.f32 %v157, %v156
        %v159 = vmul.f32 %v143, 2.0
        %v160 = vsub.f32 %v158, %v159
        %v161 = vmul.f32 %v160, 0.33333334
        %v163 = vlaneseq
        %v164 = vshrl.u32 %v163, 7
        %v165 = vsub.s32 0, %v164
        %v166 = vrot.slane %v143, %v165
        %v167 = vlaneseq
        %v168 = vshrl.u32 %v167, 7
        %v169 = vsub.s32 1, %v168
        %v170 = vrot.slane %v143, %v169
        %v171 = vlaneseq
        %v172 = vshrl.u32 %v171, 7
        %v173 = vsub.s32 2, %v172
        %v174 = vrot.slane %v143, %v173
        %v175 = vlaneseq
        %v176 = vshrl.u32 %v175, 7
        %v177 = vsub.s32 3, %v176
        %v178 = vrot.slane %v143, %v177
        %v184 = vlaneseq
        %v185 = vshrl.u32 %v184, 7
        %v186 = vsub.s32 0, %v185
        %v187 = vrot.slane %v156, %v186
        %v188 = vlaneseq
        %v189 = vshrl.u32 %v188, 7
        %v190 = vsub.s32 1, %v189
        %v191 = vrot.slane %v156, %v190
        %v192 = vlaneseq
        %v193 = vshrl.u32 %v192, 7
        %v194 = vsub.s32 2, %v193
        %v195 = vrot.slane %v156, %v194
        %v196 = vlaneseq
        %v197 = vshrl.u32 %v196, 7
        %v198 = vsub.s32 3, %v197
        %v199 = vrot.slane %v156, %v198
        %v205 = vlaneseq
        %v206 = vshrl.u32 %v205, 7
        %v207 = vsub.s32 0, %v206
        %v208 = vrot.slane %v161, %v207
        %v209 = vlaneseq
        %v210 = vshrl.u32 %v209, 7
        %v211 = vsub.s32 1, %v210
        %v212 = vrot.slane %v161, %v211
        %v213 = vlaneseq
        %v214 = vshrl.u32 %v213, 7
        %v215 = vsub.s32 2, %v214
        %v216 = vrot.slane %v161, %v215
        %v217 = vlaneseq
        %v218 = vshrl.u32 %v217, 7
        %v219 = vsub.s32 3, %v218
        %v220 = vrot.slane %v161, %v219
        %vm225 = vcmask 1040384
        %v226 = vsel %vm225, 1.0, %v166
        %v227 = vsel %vm225, 1.0, %v170
        %v228 = vsel %vm225, 1.0, %v174
        %v229 = vsel %vm225, 1.0, %v178
        %vm230 = vcmask 1041408
        %v231 = vsel %vm230, %v226, %v187
        %v232 = vsel %vm230, %v227, %v191
        %v233 = vsel %vm230, %v228, %v195
        %v234 = vsel %vm230, %v229, %v199
        %vm235 = vcmask 1042432
        %v236 = vsel %vm235, %v231, %v208
        %v237 = vsel %vm235, %v232, %v212
        %v238 = vsel %vm235, %v233, %v216
        %v239 = vsel %vm235, %v234, %v220
        %v241 = vlaneseq
        %v242 = vshrl.u32 %v241, 7
        %v243 = vsub.s32 0, %v242
        %v244 = vrot.slane %v139, %v243
        %v245 = vlaneseq
        %v246 = vshrl.u32 %v245, 7
        %v247 = vsub.s32 1, %v246
        %v248 = vrot.slane %v139, %v247
        %v249 = vlaneseq
        %v250 = vshrl.u32 %v249, 7
        %v251 = vsub.s32 2, %v250
        %v252 = vrot.slane %v139, %v251
        %v253 = vlaneseq
        %v254 = vshrl.u32 %v253, 7
        %v255 = vsub.s32 3, %v254
        %v256 = vrot.slane %v139, %v255
        %v261 = vmul.f32 %v244, %v236
        %v262 = vmul.f32 %v248, %v237
        %v263 = vmul.f32 %v252, %v238
        %v264 = vmul.f32 %v256, %v239
        %v266 = vlaneseq
        %v267 = vshrl.u32 %v266, 7
        %v268 = vsub.s32 0, %v267
        %v269 = vrot.slane %v147, %v268
        %v270 = vlaneseq
        %v271 = vshrl.u32 %v270, 7
        %v272 = vsub.s32 1, %v271
        %v273 = vrot.slane %v147, %v272
        %v274 = vlaneseq
        %v275 = vshrl.u32 %v274, 7
        %v276 = vsub.s32 2, %v275
        %v277 = vrot.slane %v147, %v276
        %v278 = vlaneseq
        %v279 = vshrl.u32 %v278, 7
        %v280 = vsub.s32 3, %v279
        %v281 = vrot.slane %v147, %v280
        %v286 = vmul.f32 %v269, %v236
        %v287 = vmul.f32 %v273, %v237
        %v288 = vmul.f32 %v277, %v238
        %v289 = vmul.f32 %v281, %v239
        %v291 = vlaneseq
        %v292 = vshrl.u32 %v291, 7
        %v293 = vsub.s32 0, %v292
        %v294 = vrot.slane %v152, %v293
        %v295 = vlaneseq
        %v296 = vshrl.u32 %v295, 7
        %v297 = vsub.s32 1, %v296
        %v298 = vrot.slane %v152, %v297
        %v299 = vlaneseq
        %v300 = vshrl.u32 %v299, 7
        %v301 = vsub.s32 2, %v300
        %v302 = vrot.slane %v152, %v301
        %v303 = vlaneseq
        %v304 = vshrl.u32 %v303, 7
        %v305 = vsub.s32 3, %v304
        %v306 = vrot.slane %v152, %v305
        %v311 = vmul.f32 %v294, %v236
        %v312 = vmul.f32 %v298, %v237
        %v313 = vmul.f32 %v302, %v238
        %v314 = vmul.f32 %v306, %v239
        %v319 = vrot.slane %v261, 4
        %v320 = vrot.slane %v262, 4
        %v321 = vrot.slane %v263, 4
        %v322 = vrot.slane %v264, 4
        %v331 = vrot.slane %v311, 4
        %v332 = vrot.slane %v312, 4
        %v333 = vrot.slane %v313, 4
        %v334 = vrot.slane %v314, 4
        %vm339 = vcmask 1043456
        %v340 = vsel %vm339, %v236, %v319
        %v341 = vsel %vm339, %v237, %v320
        %v342 = vsel %vm339, %v238, %v321
        %v343 = vsel %vm339, %v239, %v322
        %v344 = vsel %vm339, %v286, %v331
        %v345 = vsel %vm339, %v287, %v332
        %v346 = vsel %vm339, %v288, %v333
        %v347 = vsel %vm339, %v289, %v334
        %348 = vxpose.xlu0.b32.start [1/16] %v340, 128
        %349 = vxpose.xlu0.b32.cont [2/16] %v344, 128
        %350 = vxpose.xlu0.b32.cont [3/16] 0.0, 128
        %351 = vxpose.xlu0.b32.cont [4/16] 0.0, 128
        %352 = vxpose.xlu0.b32.cont [5/16] 0.0, 128
        %353 = vxpose.xlu0.b32.cont [6/16] 0.0, 128
        %354 = vxpose.xlu0.b32.cont [7/16] 0.0, 128
        %355 = vxpose.xlu0.b32.cont [8/16] 0.0, 128
        %356 = vxpose.xlu0.b32.cont [9/16] 0.0, 128
        %357 = vxpose.xlu0.b32.cont [10/16] 0.0, 128
        %358 = vxpose.xlu0.b32.cont [11/16] 0.0, 128
        %359 = vxpose.xlu0.b32.cont [12/16] 0.0, 128
        %360 = vxpose.xlu0.b32.cont [13/16] 0.0, 128
        %361 = vxpose.xlu0.b32.cont [14/16] 0.0, 128
        %362 = vxpose.xlu0.b32.cont [15/16] 0.0, 128
        %363 = vxpose.xlu0.b32.end [16/16] 0.0, 128
        %v364 = vpop.trf.xlu0
        %v365 = vpop.trf.xlu0
        %v366 = vpop.trf.xlu0
        %v367 = vpop.trf.xlu0
        %v368 = vpop.trf.xlu0
        %v369 = vpop.trf.xlu0
        %v370 = vpop.trf.xlu0
        %v371 = vpop.trf.xlu0
        %v372 = vpop.trf.xlu0
        %v373 = vpop.trf.xlu0
        %v374 = vpop.trf.xlu0
        %v375 = vpop.trf.xlu0
        %v376 = vpop.trf.xlu0
        %v377 = vpop.trf.xlu0
        %v378 = vpop.trf.xlu0
        %v379 = vpop.trf.xlu0
        %380 = vxpose.xlu0.b32.start [1/16] %v341, 128
        %381 = vxpose.xlu0.b32.cont [2/16] %v345, 128
        %382 = vxpose.xlu0.b32.cont [3/16] 0.0, 128
        %383 = vxpose.xlu0.b32.cont [4/16] 0.0, 128
        %384 = vxpose.xlu0.b32.cont [5/16] 0.0, 128
        %385 = vxpose.xlu0.b32.cont [6/16] 0.0, 128
        %386 = vxpose.xlu0.b32.cont [7/16] 0.0, 128
        %387 = vxpose.xlu0.b32.cont [8/16] 0.0, 128
        %388 = vxpose.xlu0.b32.cont [9/16] 0.0, 128
        %389 = vxpose.xlu0.b32.cont [10/16] 0.0, 128
        %390 = vxpose.xlu0.b32.cont [11/16] 0.0, 128
        %391 = vxpose.xlu0.b32.cont [12/16] 0.0, 128
        %392 = vxpose.xlu0.b32.cont [13/16] 0.0, 128
        %393 = vxpose.xlu0.b32.cont [14/16] 0.0, 128
        %394 = vxpose.xlu0.b32.cont [15/16] 0.0, 128
        %395 = vxpose.xlu0.b32.end [16/16] 0.0, 128
        %v396 = vpop.trf.xlu0
        %v397 = vpop.trf.xlu0
        %v398 = vpop.trf.xlu0
        %v399 = vpop.trf.xlu0
        %v400 = vpop.trf.xlu0
        %v401 = vpop.trf.xlu0
        %v402 = vpop.trf.xlu0
        %v403 = vpop.trf.xlu0
        %v404 = vpop.trf.xlu0
        %v405 = vpop.trf.xlu0
        %v406 = vpop.trf.xlu0
        %v407 = vpop.trf.xlu0
        %v408 = vpop.trf.xlu0
        %v409 = vpop.trf.xlu0
        %v410 = vpop.trf.xlu0
        %v411 = vpop.trf.xlu0
        %412 = vxpose.xlu0.b32.start [1/16] %v342, 128
        %413 = vxpose.xlu0.b32.cont [2/16] %v346, 128
        %414 = vxpose.xlu0.b32.cont [3/16] 0.0, 128
        %415 = vxpose.xlu0.b32.cont [4/16] 0.0, 128
        %416 = vxpose.xlu0.b32.cont [5/16] 0.0, 128
        %417 = vxpose.xlu0.b32.cont [6/16] 0.0, 128
        %418 = vxpose.xlu0.b32.cont [7/16] 0.0, 128
        %419 = vxpose.xlu0.b32.cont [8/16] 0.0, 128
        %420 = vxpose.xlu0.b32.cont [9/16] 0.0, 128
        %421 = vxpose.xlu0.b32.cont [10/16] 0.0, 128
        %422 = vxpose.xlu0.b32.cont [11/16] 0.0, 128
        %423 = vxpose.xlu0.b32.cont [12/16] 0.0, 128
        %424 = vxpose.xlu0.b32.cont [13/16] 0.0, 128
        %425 = vxpose.xlu0.b32.cont [14/16] 0.0, 128
        %426 = vxpose.xlu0.b32.cont [15/16] 0.0, 128
        %427 = vxpose.xlu0.b32.end [16/16] 0.0, 128
        %v428 = vpop.trf.xlu0
        %v429 = vpop.trf.xlu0
        %v430 = vpop.trf.xlu0
        %v431 = vpop.trf.xlu0
        %v432 = vpop.trf.xlu0
        %v433 = vpop.trf.xlu0
        %v434 = vpop.trf.xlu0
        %v435 = vpop.trf.xlu0
        %v436 = vpop.trf.xlu0
        %v437 = vpop.trf.xlu0
        %v438 = vpop.trf.xlu0
        %v439 = vpop.trf.xlu0
        %v440 = vpop.trf.xlu0
        %v441 = vpop.trf.xlu0
        %v442 = vpop.trf.xlu0
        %v443 = vpop.trf.xlu0
        %444 = vxpose.xlu0.b32.start [1/16] %v343, 128
        %445 = vxpose.xlu0.b32.cont [2/16] %v347, 128
        %446 = vxpose.xlu0.b32.cont [3/16] 0.0, 128
        %447 = vxpose.xlu0.b32.cont [4/16] 0.0, 128
        %448 = vxpose.xlu0.b32.cont [5/16] 0.0, 128
        %449 = vxpose.xlu0.b32.cont [6/16] 0.0, 128
        %450 = vxpose.xlu0.b32.cont [7/16] 0.0, 128
        %451 = vxpose.xlu0.b32.cont [8/16] 0.0, 128
        %452 = vxpose.xlu0.b32.cont [9/16] 0.0, 128
        %453 = vxpose.xlu0.b32.cont [10/16] 0.0, 128
        %454 = vxpose.xlu0.b32.cont [11/16] 0.0, 128
        %455 = vxpose.xlu0.b32.cont [12/16] 0.0, 128
        %456 = vxpose.xlu0.b32.cont [13/16] 0.0, 128
        %457 = vxpose.xlu0.b32.cont [14/16] 0.0, 128
        %458 = vxpose.xlu0.b32.cont [15/16] 0.0, 128
        %459 = vxpose.xlu0.b32.end [16/16] 0.0, 128
        %v460 = vpop.trf.xlu0
        %v461 = vpop.trf.xlu0
        %v462 = vpop.trf.xlu0
        %v463 = vpop.trf.xlu0
        %v464 = vpop.trf.xlu0
        %v465 = vpop.trf.xlu0
        %v466 = vpop.trf.xlu0
        %v467 = vpop.trf.xlu0
        %v468 = vpop.trf.xlu0
        %v469 = vpop.trf.xlu0
        %v470 = vpop.trf.xlu0
        %v471 = vpop.trf.xlu0
        %v472 = vpop.trf.xlu0
        %v473 = vpop.trf.xlu0
        %v474 = vpop.trf.xlu0
        %v475 = vpop.trf.xlu0
        %vm476 = vcmask 130048
        %477 = vst.msk [vmem:[%s135] sm:$0xff] %vm476, %v364
        %478 = vst.msk [vmem:[%s135 + $0x8] sm:$0xff] %vm476, %v365
        %479 = vst.msk [vmem:[%s135 + $0x10] sm:$0xff] %vm476, %v366
        %480 = vst.msk [vmem:[%s135 + $0x18] sm:$0xff] %vm476, %v367
        %481 = vst.msk [vmem:[%s135 + $0x20] sm:$0xff] %vm476, %v368
        %482 = vst.msk [vmem:[%s135 + $0x28] sm:$0xff] %vm476, %v369
        %483 = vst.msk [vmem:[%s135 + $0x30] sm:$0xff] %vm476, %v370
        %484 = vst.msk [vmem:[%s135 + $0x38] sm:$0xff] %vm476, %v371
        %485 = vst.msk [vmem:[%s135 + $0x40] sm:$0xff] %vm476, %v372
        %486 = vst.msk [vmem:[%s135 + $0x48] sm:$0xff] %vm476, %v373
        %487 = vst.msk [vmem:[%s135 + $0x50] sm:$0xff] %vm476, %v374
        %488 = vst.msk [vmem:[%s135 + $0x58] sm:$0xff] %vm476, %v375
        %489 = vst.msk [vmem:[%s135 + $0x60] sm:$0xff] %vm476, %v376
        %490 = vst.msk [vmem:[%s135 + $0x68] sm:$0xff] %vm476, %v377
        %491 = vst.msk [vmem:[%s135 + $0x70] sm:$0xff] %vm476, %v378
        %492 = vst.msk [vmem:[%s135 + $0x78] sm:$0xff] %vm476, %v379
        %493 = vst.msk [vmem:[%s135 + $0x80] sm:$0xff] %vm476, %v396
        %494 = vst.msk [vmem:[%s135 + $0x88] sm:$0xff] %vm476, %v397
        %495 = vst.msk [vmem:[%s135 + $0x90] sm:$0xff] %vm476, %v398
        %496 = vst.msk [vmem:[%s135 + $0x98] sm:$0xff] %vm476, %v399
        %497 = vst.msk [vmem:[%s135 + $0xa0] sm:$0xff] %vm476, %v400
        %498 = vst.msk [vmem:[%s135 + $0xa8] sm:$0xff] %vm476, %v401
        %499 = vst.msk [vmem:[%s135 + $0xb0] sm:$0xff] %vm476, %v402
        %500 = vst.msk [vmem:[%s135 + $0xb8] sm:$0xff] %vm476, %v403
        %501 = vst.msk [vmem:[%s135 + $0xc0] sm:$0xff] %vm476, %v404
        %502 = vst.msk [vmem:[%s135 + $0xc8] sm:$0xff] %vm476, %v405
        %503 = vst.msk [vmem:[%s135 + $0xd0] sm:$0xff] %vm476, %v406
        %504 = vst.msk [vmem:[%s135 + $0xd8] sm:$0xff] %vm476, %v407
        %505 = vst.msk [vmem:[%s135 + $0xe0] sm:$0xff] %vm476, %v408
        %506 = vst.msk [vmem:[%s135 + $0xe8] sm:$0xff] %vm476, %v409
        %507 = vst.msk [vmem:[%s135 + $0xf0] sm:$0xff] %vm476, %v410
        %508 = vst.msk [vmem:[%s135 + $0xf8] sm:$0xff] %vm476, %v411
        %509 = vst.msk [vmem:[%s135 + $0x100] sm:$0xff] %vm476, %v428
        %510 = vst.msk [vmem:[%s135 + $0x108] sm:$0xff] %vm476, %v429
        %511 = vst.msk [vmem:[%s135 + $0x110] sm:$0xff] %vm476, %v430
        %512 = vst.msk [vmem:[%s135 + $0x118] sm:$0xff] %vm476, %v431
        %513 = vst.msk [vmem:[%s135 + $0x120] sm:$0xff] %vm476, %v432
        %514 = vst.msk [vmem:[%s135 + $0x128] sm:$0xff] %vm476, %v433
        %515 = vst.msk [vmem:[%s135 + $0x130] sm:$0xff] %vm476, %v434
        %516 = vst.msk [vmem:[%s135 + $0x138] sm:$0xff] %vm476, %v435
        %517 = vst.msk [vmem:[%s135 + $0x140] sm:$0xff] %vm476, %v436
        %518 = vst.msk [vmem:[%s135 + $0x148] sm:$0xff] %vm476, %v437
        %519 = vst.msk [vmem:[%s135 + $0x150] sm:$0xff] %vm476, %v438
        %520 = vst.msk [vmem:[%s135 + $0x158] sm:$0xff] %vm476, %v439
        %521 = vst.msk [vmem:[%s135 + $0x160] sm:$0xff] %vm476, %v440
        %522 = vst.msk [vmem:[%s135 + $0x168] sm:$0xff] %vm476, %v441
        %523 = vst.msk [vmem:[%s135 + $0x170] sm:$0xff] %vm476, %v442
        %524 = vst.msk [vmem:[%s135 + $0x178] sm:$0xff] %vm476, %v443
        %525 = vst.msk [vmem:[%s135 + $0x180] sm:$0xff] %vm476, %v460
        %526 = vst.msk [vmem:[%s135 + $0x188] sm:$0xff] %vm476, %v461
        %527 = vst.msk [vmem:[%s135 + $0x190] sm:$0xff] %vm476, %v462
        %528 = vst.msk [vmem:[%s135 + $0x198] sm:$0xff] %vm476, %v463
        %529 = vst.msk [vmem:[%s135 + $0x1a0] sm:$0xff] %vm476, %v464
        %530 = vst.msk [vmem:[%s135 + $0x1a8] sm:$0xff] %vm476, %v465
        %531 = vst.msk [vmem:[%s135 + $0x1b0] sm:$0xff] %vm476, %v466
        %532 = vst.msk [vmem:[%s135 + $0x1b8] sm:$0xff] %vm476, %v467
        %533 = vst.msk [vmem:[%s135 + $0x1c0] sm:$0xff] %vm476, %v468
        %534 = vst.msk [vmem:[%s135 + $0x1c8] sm:$0xff] %vm476, %v469
        %535 = vst.msk [vmem:[%s135 + $0x1d0] sm:$0xff] %vm476, %v470
        %536 = vst.msk [vmem:[%s135 + $0x1d8] sm:$0xff] %vm476, %v471
        %537 = vst.msk [vmem:[%s135 + $0x1e0] sm:$0xff] %vm476, %v472
        %538 = vst.msk [vmem:[%s135 + $0x1e8] sm:$0xff] %vm476, %v473
        %539 = vst.msk [vmem:[%s135 + $0x1f0] sm:$0xff] %vm476, %v474
        %540 = vst.msk [vmem:[%s135 + $0x1f8] sm:$0xff] %vm476, %v475
        %s541 = smul.u32 64, %s15
        %p542 = scmp.lt.s32.totalorder %s541, 127
        %s543 = scalar_select %p542, %s541, 127
        %s544 = smul.addr %s543, 8
        %s545 = scalar_lea.vmem %s1, %s544
        // Predicated region
        $region29: #{tpu_custom_call.1} parent=23 // pred_check
          %p546 = pneg %p59
        $region30: #{tpu_custom_call.1} parent=23 // pred_check_branch
          %548 = sbr.rel (%p546) target = $region32
        $region31: #{tpu_custom_call.1} parent=23 // pred_region
          %s549 = smul.u32 64, %s15
        $region32: #{tpu_custom_call.1} parent=23 // pred_fallthru
          _
      $region24: #{tpu_custom_call.1} parent=5 // pred_fallthru
        _
      %p550 = scmp.le.s32.totalorder 2, %s10
      // Predicated region
      $region33: #{tpu_custom_call.1} parent=5 // pred_check
        %p551 = pneg %p550
      $region34: #{tpu_custom_call.1} parent=5 // pred_check_branch
        %553 = sbr.rel (%p551) target = $region36
      $region35: #{tpu_custom_call.1} parent=5 // pred_region
        %s554 = ssub.s32 %s10, 2
        // Predicated region
        $region37: #{tpu_custom_call.1} parent=35 // pred_check
          %p555 = pneg %p65
        $region38: #{tpu_custom_call.1} parent=35 // pred_check_branch
          %557 = sbr.rel (%p555) target = $region40
        $region39: #{tpu_custom_call.1} parent=35 // pred_region
          %s558 = smul.u32 64, %s16
          %p559 = scmp.lt.s32.totalorder %s558, 127
          %s560 = scalar_select %p559, %s558, 127
          %s561 = smul.addr %s560, 8
          %s562 = scalar_lea.vmem %s1, %s561
        $region40: #{tpu_custom_call.1} parent=35 // pred_fallthru
          _
      $region36: #{tpu_custom_call.1} parent=5 // pred_fallthru
        _
    $region6: #{tpu_custom_call.1} parent=1 // loop_footer
      %s14 = sadd.s32 1, %s10
    $region7: #{tpu_custom_call.1} parent=1 // loop_footer_branch
      %9 = sbr.rel target = $region3
    $region8: #{tpu_custom_call.1} parent=1 // loop_exit
      _
    %563 = vsyncpa [#allocation3], 1
    %s564 = scalar_lea.sflag [#allocation3], 1
    %565 = vsyncpa %s564, 1

</llo_original>
